<compile_context>
chip_gen: v6e
topology: v6e:2x2x1
jax: 0.10.0
libtpu: 0.0.40
codegen_flags: <defaults>
</compile_context>

<pallas_src>
import functools

import jax
import jax.numpy as jnp
from jax import lax
from jax.experimental import pallas as pl
from jax.experimental.pallas import tpu as pltpu


def _round_up(x, m):
    return (x + m - 1) // m * m


def _agg_linear_relu_kernel(adj_ref, x_ref, wT_ref, b_ref, h_ref, stats_ref, acc_ref,
                            *, n_nodes, in_feats, tm, needs_row_mask):
    """Pass 1: (adj @ [x | 1]) -> mean-agg -> Linear -> ReLU; emits h and per-tile BN partials."""
    # NOTE: program_id / num_programs are read ONLY here at top level; calling them inside a
    # pl.when body breaks lowering (they end up in a cond sub-jaxpr with no platform rule).
    k = pl.program_id(1)
    n_k = pl.num_programs(1)
    row_start = pl.program_id(0) * tm

    @pl.when(k == 0)
    def _():
        acc_ref[...] = jnp.zeros_like(acc_ref)

    # int8 adjacency from HBM, upcast to bf16 (0/1 exact) feeding a bf16 x bf16 MXU matmul with
    # f32 accumulation.  The fused ones-column of x makes the in-degree fall out of the same
    # matmul (no separate XLU row reduction over adj).
    acc_ref[...] += jnp.dot(adj_ref[...].astype(jnp.bfloat16), x_ref[...],
                            preferred_element_type=jnp.float32)

    @pl.when(k == n_k - 1)
    def _():
        acc = acc_ref[...]                                  # (tm, fin_pad) f32
        deg = acc[:, in_feats:in_feats + 1]                 # (tm, 1) in-degree (exact in f32)
        agg = acc * (1.0 / jnp.maximum(deg, 1.0))           # mean aggregation; isolated rows are 0

        # Linear (+bias) in f32 on the MXU, then ReLU.  NOTE: if out_feats < in_feats it would
        # be cheaper to swap the matmul order (x @ W^T first, then adj @ ...); not the case here.
        h = jnp.dot(agg, wT_ref[...], preferred_element_type=jnp.float32) + b_ref[...]
        h = jnp.maximum(h, 0.0)

        if needs_row_mask:
            # Zero padded rows so they neither corrupt BN statistics nor the stored output.
            row_ids = row_start + lax.broadcasted_iota(jnp.int32, (tm, 1), 0)
            h = h * (row_ids < n_nodes).astype(jnp.float32)

        h_ref[...] = h
        stats_ref[0, 0:1, :] = jnp.sum(h, axis=0, keepdims=True)        # sum(h)
        stats_ref[0, 1:2, :] = jnp.sum(h * h, axis=0, keepdims=True)    # sum(h^2)


def encoder_layer(adj, x, weight, bias, gamma, beta, *, tm=1024, tk=1024, eps=1e-5):
    """adj: (N,N) dst-row adjacency (adj[i,j]=1 iff edge j->i), x: (N,in_feats),
    weight: (out_feats, in_feats) PyTorch nn.Linear layout, bias/gamma/beta: (out_feats,)."""
    N, in_feats = x.shape
    out_feats = weight.shape[0]

    # Lane-dense padding: +1 column in x for the fused degree, feature dims to multiples of 128.
    fin_pad = _round_up(in_feats + 1, 128)
    fout_pad = _round_up(out_feats, 128)

    # tm: multiple of 32 (int8 sublane packing), capped near ceil(N/2) so the "parallel" row
    # axis has >=2 tiles (both v7x TensorCores busy).  tk: multiple of 128 (lane dim).
    tm_cap = max(32, _round_up((N + 1) // 2, 32))
    tm = max(32, min(_round_up(tm, 32), tm_cap))
    tk = max(128, min(_round_up(tk, 128), _round_up(N, 128)))

    n_pad_r = _round_up(N, tm)
    n_pad_c = _round_up(N, tk)
    n_row_tiles = n_pad_r // tm
    n_k_tiles = n_pad_c // tk
    needs_row_mask = n_pad_r != N

    # NOTE(perf): for a multi-layer GCN the graph is fixed across layers/steps -- build this
    # padded int8 adjacency ONCE outside the per-layer call and reuse it (the pad/cast itself
    # streams ~5*N^2 bytes of HBM).
    adj_p = jnp.zeros((n_pad_r, n_pad_c), jnp.int8).at[:N, :N].set(adj.astype(jnp.int8))
    x_aug = jnp.zeros((n_pad_c, fin_pad), jnp.bfloat16)
    x_aug = x_aug.at[:N, :in_feats].set(x.astype(jnp.bfloat16))
    x_aug = x_aug.at[:N, in_feats].set(1.0)                 # ones column -> degree via the matmul

    wT_p = jnp.zeros((fin_pad, fout_pad), jnp.float32).at[:in_feats, :out_feats].set(
        weight.T.astype(jnp.float32))
    b_p = jnp.zeros((1, fout_pad), jnp.float32).at[0, :out_feats].set(
        bias.astype(jnp.float32))

    flops = 2 * n_pad_r * n_pad_c * fin_pad + 2 * n_pad_r * fin_pad * fout_pad
    bytes_accessed = (adj_p.size * 1 + x_aug.size * 2 + wT_p.size * 4
                      + n_pad_r * fout_pad * 4 + n_row_tiles * 2 * fout_pad * 4)

    # VMEM budget from the actual tile working set (double-buffered ins/outs + scratch),
    # capped at 48 MiB to leave headroom inside v7x's 64 MiB physical VMEM.
    vmem_bytes = (2 * tm * tk * 1                       # adj tiles (int8, double-buffered)
                  + 2 * tk * fin_pad * 2                # x tiles (bf16)
                  + 2 * fin_pad * fout_pad * 4          # resident W^T
                  + 2 * fout_pad * 4                    # bias
                  + tm * fin_pad * 4                    # accumulator scratch
                  + 2 * tm * fout_pad * 4               # h output tiles
                  + 2 * 2 * fout_pad * 4)               # stats output tiles
    vmem_limit = min(48 * 1024 * 1024, max(32 * 1024 * 1024, vmem_bytes + (8 << 20)))

    kernel1 = functools.partial(_agg_linear_relu_kernel,
                                n_nodes=N, in_feats=in_feats, tm=tm,
                                needs_row_mask=needs_row_mask)

    h_full, stats = pl.pallas_call(
        kernel1,
        out_shape=(
            jax.ShapeDtypeStruct((n_pad_r, fout_pad), jnp.float32),        # ReLU(Linear(agg))
            jax.ShapeDtypeStruct((n_row_tiles, 2, fout_pad), jnp.float32),  # per-tile [sum; sumsq]
        ),
        grid_spec=pltpu.PrefetchScalarGridSpec(
            num_scalar_prefetch=0,
            grid=(n_row_tiles, n_k_tiles),
            in_specs=[
                pl.BlockSpec((tm, tk), lambda i, k: (i, k)),               # adj tile (int8)
                pl.BlockSpec((tk, fin_pad), lambda i, k: (k, 0)),          # x (+ones) tile (bf16)
                pl.BlockSpec((fin_pad, fout_pad), lambda i, k: (0, 0)),    # W^T (resident)
                pl.BlockSpec((1, fout_pad), lambda i, k: (0, 0)),          # bias
            ],
            out_specs=[
                pl.BlockSpec((tm, fout_pad), lambda i, k: (i, 0)),
                pl.BlockSpec((1, 2, fout_pad), lambda i, k: (i, 0, 0)),
            ],
            scratch_shapes=[pltpu.VMEM((tm, fin_pad), jnp.float32)],       # adj@x accumulator
        ),
        compiler_params=pltpu.CompilerParams(
            dimension_semantics=("parallel", "arbitrary"),
            vmem_limit_bytes=vmem_limit,
        ),
        cost_estimate=pl.CostEstimate(flops=flops, transcendentals=0,
                                      bytes_accessed=bytes_accessed),
    )(adj_p, x_aug, wT_p, b_p)

    # BatchNorm finalize: exact global (over all N nodes) training-mode batch statistics from
    # the per-tile partial sums; tiny O(out_feats) work.  The scale/shift FMA + final slice stay
    # in plain XLA so they fuse with downstream consumers (no second pallas_call round trip).
    col_sum = jnp.sum(stats[:, 0, :out_feats], axis=0)
    col_sumsq = jnp.sum(stats[:, 1, :out_feats], axis=0)
    mu = col_sum / N
    var = jnp.maximum(col_sumsq / N - mu * mu, 0.0)          # biased (training-mode) variance
    scale = gamma.astype(jnp.float32) / jnp.sqrt(var + eps)
    shift = beta.astype(jnp.float32) - mu * scale

    out = h_full[:N, :out_feats] * scale + shift
    # TODO(synk): train-mode dropout would need pltpu.prng_seed/prng_random_bits; eval-mode
    # Dropout is the identity, so nothing more to do here.
    return out


def reference(adj, x, weight, bias, gamma, beta, eps=1e-5):
    hp = lax.Precision.HIGHEST
    deg = jnp.sum(adj, axis=-1, keepdims=True)
    agg = jnp.where(deg > 0,
                    jnp.dot(adj, x, precision=hp) / jnp.maximum(deg, 1.0), 0.0)
    h = jnp.dot(agg, weight.T, precision=hp) + bias
    h = jnp.maximum(h, 0.0)
    mu = jnp.mean(h, axis=0, keepdims=True)
    var = jnp.mean((h - mu) ** 2, axis=0, keepdims=True)
    return ((h - mu) / jnp.sqrt(var + eps)) * gamma + beta


if __name__ == "__main__":
    N, in_feats, out_feats = 300, 32, 64

    key = jax.random.PRNGKey(0)
    k_x, k_w, k_b, k_adj = jax.random.split(key, 4)

    x = jax.random.normal(k_x, (N, in_feats), dtype=jnp.float32)

    # Deterministic parameter init (shapes match nn.Linear(in,out) + BatchNorm1d(out)).
    bound = 1.0 / (in_feats ** 0.5)
    weight = jax.random.uniform(k_w, (out_feats, in_feats), jnp.float32, -bound, bound)
    bias = jax.random.uniform(k_b, (out_feats,), jnp.float32, -bound, bound)
    gamma = jnp.ones((out_feats,), jnp.float32)
    beta = jnp.zeros((out_feats,), jnp.float32)

    # Deterministic random directed graph (dst-row adjacency) with self-loops.
    adj = (jax.random.uniform(k_adj, (N, N)) < 0.05).astype(jnp.float32)
    adj = jnp.maximum(adj, jnp.eye(N, dtype=jnp.float32))

    # Small tiles here to exercise the multi-tile grid path (K accumulation + cross-tile BN).
    out = encoder_layer(adj, x, weight, bias, gamma, beta, tm=128, tk=128)
    jax.block_until_ready(out)

    # Reference on the same bf16-quantized x the kernel feeds to the MXU (int8/bf16 adj is exact).
    x_q = x.astype(jnp.bfloat16).astype(jnp.float32)
    ref = reference(adj, x_q, weight, bias, gamma, beta)

    assert out.shape == (N, out_feats)
    err = float(jnp.max(jnp.abs(out - ref)))
    assert jnp.allclose(out, ref, atol=2e-3, rtol=2e-3), f"max abs err = {err}"

    print("KERNEL_OK")
</pallas_src>

<mosaic_0001>
module attributes {stable_mosaic.version = 11 : i64} {
  func.func @_agg_linear_relu_kernel(%arg0: i32, %arg1: i32, %arg2: memref<128x128xi8, #tpu.memory_space<vmem>>, %arg3: memref<128x128xbf16, #tpu.memory_space<vmem>>, %arg4: memref<128x128xf32, #tpu.memory_space<vmem>>, %arg5: memref<1x128xf32, #tpu.memory_space<vmem>>, %arg6: memref<128x128xf32, #tpu.memory_space<vmem>>, %arg7: memref<1x2x128xf32, #tpu.memory_space<vmem>>, %arg8: memref<128x128xf32, #tpu.memory_space<vmem>>) attributes {dimension_semantics = [#tpu.dimension_semantics<parallel>, #tpu.dimension_semantics<arbitrary>], iteration_bounds = array<i64: 3, 3>, scalar_prefetch = 0 : i64, scratch_operands = 1 : i64, tpu.core_type = #tpu.core_type<tc>, window_params = [{transform_indices = @transform_0, window_bounds = array<i64: 128, 128>}, {transform_indices = @transform_1, window_bounds = array<i64: 128, 128>}, {pipeline_mode = #tpu.pipeline_mode<synchronous>, transform_indices = @transform_2, window_bounds = array<i64: 128, 128>}, {pipeline_mode = #tpu.pipeline_mode<synchronous>, transform_indices = @transform_3, window_bounds = array<i64: 1, 128>}, {transform_indices = @transform_4, window_bounds = array<i64: 128, 128>}, {transform_indices = @transform_5, window_bounds = array<i64: 1, 2, 128>}]} {
    %c128_i32 = arith.constant 128 : i32
    %0 = arith.muli %arg0, %c128_i32 : i32
    %c0_i32 = arith.constant 0 : i32
    %1 = arith.cmpi eq, %arg1, %c0_i32 : i32
    %2 = arith.extui %1 : i1 to i32
    %c0_i32_0 = arith.constant 0 : i32
    %3 = arith.cmpi ne, %2, %c0_i32_0 : i32
    scf.if %3 {
      %cst_9 = arith.constant 0.000000e+00 : f32
      %14 = vector.broadcast %cst_9 : f32 to vector<128x128xf32>
      %c0_10 = arith.constant 0 : index
      %c0_11 = arith.constant 0 : index
      %15 = vector.load %arg8[%c0_10, %c0_11] : memref<128x128xf32, #tpu.memory_space<vmem>>, vector<128x128xf32>
      tpu.vector_store %arg8[%c0_10, %c0_11], %14 {strides = array<i32>} : memref<128x128xf32, #tpu.memory_space<vmem>>, vector<128x128xf32>,
    } else {
    }
    %c0 = arith.constant 0 : index
    %c0_1 = arith.constant 0 : index
    %4 = vector.load %arg8[%c0, %c0_1] : memref<128x128xf32, #tpu.memory_space<vmem>>, vector<128x128xf32>
    %c0_2 = arith.constant 0 : index
    %c0_3 = arith.constant 0 : index
    %5 = vector.load %arg2[%c0_2, %c0_3] : memref<128x128xi8, #tpu.memory_space<vmem>>, vector<128x128xi8>
    %6 = arith.sitofp %5 : vector<128x128xi8> to vector<128x128xbf16>
    %c0_4 = arith.constant 0 : index
    %c0_5 = arith.constant 0 : index
    %7 = vector.load %arg3[%c0_4, %c0_5] : memref<128x128xbf16, #tpu.memory_space<vmem>>, vector<128x128xbf16>
    %cst = arith.constant dense<0.000000e+00> : vector<128x128xf32>
    %8 = tpu.matmul %6, %7, %cst {dimension_numbers = #tpu.dot_dimension_numbers<[1], [0], [0], [1], [0, 0, 1, 1], [], []>} : vector<128x128xbf16>, vector<128x128xbf16>, vector<128x128xf32> -> vector<128x128xf32>
    %9 = arith.addf %4, %8 : vector<128x128xf32>
    %c0_6 = arith.constant 0 : index
    %c0_7 = arith.constant 0 : index
    %10 = vector.load %arg8[%c0_6, %c0_7] : memref<128x128xf32, #tpu.memory_space<vmem>>, vector<128x128xf32>
    tpu.vector_store %arg8[%c0_6, %c0_7], %9 {strides = array<i32>} : memref<128x128xf32, #tpu.memory_space<vmem>>, vector<128x128xf32>,
    %c2_i32 = arith.constant 2 : i32
    %11 = arith.cmpi eq, %arg1, %c2_i32 : i32
    %12 = arith.extui %11 : i1 to i32
    %c0_i32_8 = arith.constant 0 : i32
    %13 = arith.cmpi ne, %12, %c0_i32_8 : i32
    scf.if %13 {
      %c0_9 = arith.constant 0 : index
      %c0_10 = arith.constant 0 : index
      %14 = vector.load %arg8[%c0_9, %c0_10] : memref<128x128xf32, #tpu.memory_space<vmem>>, vector<128x128xf32>
      %15 = vector.extract_strided_slice %14 {offsets = [0, 32], sizes = [128, 1], strides = [1, 1]} : vector<128x128xf32> to vector<128x1xf32>
      %cst_11 = arith.constant 1.000000e+00 : f32
      %16 = vector.broadcast %cst_11 : f32 to vector<128x1xf32>
      %17 = arith.maximumf %15, %16 : vector<128x1xf32>
      %cst_12 = arith.constant 1.000000e+00 : f32
      %18 = vector.broadcast %cst_12 : f32 to vector<128x1xf32>
      %19 = arith.divf %18, %17 : vector<128x1xf32>
      %20 = vector.broadcast %19 : vector<128x1xf32> to vector<128x128xf32>
      %21 = arith.mulf %14, %20 : vector<128x128xf32>
      %c0_13 = arith.constant 0 : index
      %c0_14 = arith.constant 0 : index
      %22 = vector.load %arg4[%c0_13, %c0_14] : memref<128x128xf32, #tpu.memory_space<vmem>>, vector<128x128xf32>
      %cst_15 = arith.constant dense<0.000000e+00> : vector<128x128xf32>
      %23 = tpu.matmul %21, %22, %cst_15 {dimension_numbers = #tpu.dot_dimension_numbers<[1], [0], [0], [1], [0, 0, 1, 1], [], []>} : vector<128x128xf32>, vector<128x128xf32>, vector<128x128xf32> -> vector<128x128xf32>
      %c0_16 = arith.constant 0 : index
      %c0_17 = arith.constant 0 : index
      %24 = vector.load %arg5[%c0_16, %c0_17] : memref<1x128xf32, #tpu.memory_space<vmem>>, vector<1x128xf32>
      %25 = vector.broadcast %24 : vector<1x128xf32> to vector<128x128xf32>
      %26 = arith.addf %23, %25 : vector<128x128xf32>
      %cst_18 = arith.constant 0.000000e+00 : f32
      %27 = vector.broadcast %cst_18 : f32 to vector<128x128xf32>
      %28 = arith.maximumf %26, %27 : vector<128x128xf32>
      %29 = tpu.iota {dimensions = array<i32: 0>} : vector<128x1xi32>
      %30 = vector.broadcast %0 : i32 to vector<128x1xi32>
      %31 = arith.addi %30, %29 : vector<128x1xi32>
      %c300_i32 = arith.constant 300 : i32
      %32 = vector.broadcast %c300_i32 : i32 to vector<128x1xi32>
      %33 = arith.cmpi slt, %31, %32 : vector<128x1xi32>
      %34 = arith.extui %33 : vector<128x1xi1> to vector<128x1xi32>
      %35 = arith.sitofp %34 : vector<128x1xi32> to vector<128x1xf32>
      %36 = vector.broadcast %35 : vector<128x1xf32> to vector<128x128xf32>
      %37 = arith.mulf %28, %36 : vector<128x128xf32>
      %c0_19 = arith.constant 0 : index
      %c0_20 = arith.constant 0 : index
      %38 = vector.load %arg6[%c0_19, %c0_20] : memref<128x128xf32, #tpu.memory_space<vmem>>, vector<128x128xf32>
      tpu.vector_store %arg6[%c0_19, %c0_20], %37 {strides = array<i32>} : memref<128x128xf32, #tpu.memory_space<vmem>>, vector<128x128xf32>,
      %cst_21 = arith.constant dense<0.000000e+00> : vector<128xf32>
      %39 = vector.multi_reduction <add>, %37, %cst_21 [0] : vector<128x128xf32> to vector<128xf32>
      %40 = vector.shape_cast %39 : vector<128xf32> to vector<1x128xf32>
      %c0_22 = arith.constant 0 : index
      %c0_23 = arith.constant 0 : index
      %c0_24 = arith.constant 0 : index
      %41 = vector.load %arg7[%c0_22, %c0_23, %c0_24] : memref<1x2x128xf32, #tpu.memory_space<vmem>>, vector<1x1x128xf32>
      %42 = vector.shape_cast %41 : vector<1x1x128xf32> to vector<1x128xf32>
      %43 = vector.shape_cast %40 : vector<1x128xf32> to vector<1x1x128xf32>
      tpu.vector_store %arg7[%c0_22, %c0_23, %c0_24], %43 {strides = array<i32>} : memref<1x2x128xf32, #tpu.memory_space<vmem>>, vector<1x1x128xf32>,
      %44 = arith.mulf %37, %37 : vector<128x128xf32>
      %cst_25 = arith.constant dense<0.000000e+00> : vector<128xf32>
      %45 = vector.multi_reduction <add>, %44, %cst_25 [0] : vector<128x128xf32> to vector<128xf32>
      %46 = vector.shape_cast %45 : vector<128xf32> to vector<1x128xf32>
      %c0_26 = arith.constant 0 : index
      %c1 = arith.constant 1 : index
      %c0_27 = arith.constant 0 : index
      %47 = vector.load %arg7[%c0_26, %c1, %c0_27] : memref<1x2x128xf32, #tpu.memory_space<vmem>>, vector<1x1x128xf32>
      %48 = vector.shape_cast %47 : vector<1x1x128xf32> to vector<1x128xf32>
      %49 = vector.shape_cast %46 : vector<1x128xf32> to vector<1x1x128xf32>
      tpu.vector_store %arg7[%c0_26, %c1, %c0_27], %49 {strides = array<i32>} : memref<1x2x128xf32, #tpu.memory_space<vmem>>, vector<1x1x128xf32>,
    } else {
    }
    return
  }
  func.func @transform_0(%arg0: i32, %arg1: i32) -> (i32, i32) {
    %c0_i32 = arith.constant 0 : i32
    return %arg0, %arg1 : i32, i32
  }
  func.func @transform_1(%arg0: i32, %arg1: i32) -> (i32, i32) {
    %c0_i32 = arith.constant 0 : i32
    %c0_i32_0 = arith.constant 0 : i32
    return %arg1, %c0_i32 : i32, i32
  }
  func.func @transform_2(%arg0: i32, %arg1: i32) -> (i32, i32) {
    %c0_i32 = arith.constant 0 : i32
    %c0_i32_0 = arith.constant 0 : i32
    %c0_i32_1 = arith.constant 0 : i32
    return %c0_i32, %c0_i32_0 : i32, i32
  }
  func.func @transform_3(%arg0: i32, %arg1: i32) -> (i32, i32) {
    %c0_i32 = arith.constant 0 : i32
    %c0_i32_0 = arith.constant 0 : i32
    %c0_i32_1 = arith.constant 0 : i32
    return %c0_i32, %c0_i32_0 : i32, i32
  }
  func.func @transform_4(%arg0: i32, %arg1: i32) -> (i32, i32) {
    %c0_i32 = arith.constant 0 : i32
    %c0_i32_0 = arith.constant 0 : i32
    return %arg0, %c0_i32 : i32, i32
  }
  func.func @transform_5(%arg0: i32, %arg1: i32) -> (i32, i32, i32) {
    %c0_i32 = arith.constant 0 : i32
    %c0_i32_0 = arith.constant 0 : i32
    %c0_i32_1 = arith.constant 0 : i32
    return %arg0, %c0_i32, %c0_i32_0 : i32, i32, i32
  }
}

</mosaic_0001>

<llo_original>
// kernel: tpu_custom_call.1
$region0: #{tpu_custom_call.1}
  #allocation0 [shape = 'u32[]', space=smem, size = 0x4, offset = 0x4, fixed_abs, tag = 'smem constant byte address 0x4 - core index']
  #allocation1 [shape = 'u32[144,128]{1,0:T(1,128)}', space=vmem, size = 0x12000, scoped, tag = 'internal scratch']
  #allocation2 [shape = 'f32[128,128]{1,0:T(8,128)}', space=vmem, size = 0x10000, scoped, tag = 'scratch operand']
  %s0 = inlined_call_operand.hbm [shape: s8[384,384], index: 0, kind: input, shape index: {}]
  %s1 = inlined_call_operand.hbm [shape: bf16[384,128], index: 1, kind: input, shape index: {}]
  %s2 = inlined_call_operand.hbm [shape: f32[128,128], index: 2, kind: input, shape index: {}]
  %s3 = inlined_call_operand.vmem [shape: f32[1,128], index: 3, kind: input, shape index: {}]
  %s4 = inlined_call_operand.hbm [shape: f32[384,128], index: 4, kind: output, shape index: {0}]
  %s5 = inlined_call_operand.hbm [shape: f32[3,2,128], index: 5, kind: output, shape index: {1}]
  %6 = xla_tuple %s4, %s5
  %s7 = sld [smem:[#allocation0]]
  $region77: #{tpu_custom_call.1} parent=0
    _
  %s9 = ssub.s32 1, %s7
  %s10 = scalar_select 0, %s9, %s7
  $region1: #{tpu_custom_call.1} parent=0
    #allocation3 [shape = 'u8[32768]{0}', space=vmem, size = 0x8000, scoped, tag = 'input window, operand 0']
    #allocation4 [shape = 's32[2]{0}', space=sflag, size = 0x8, scoped, tag = 'scoped memory for tpu_custom_call.1']
    #allocation5 [shape = 's32[2]{0}', space=sflag, size = 0x8, scoped, tag = 'scoped memory for tpu_custom_call.1']
    #allocation6 [shape = 'u8[65536]{0}', space=vmem, size = 0x10000, scoped, tag = 'input window, operand 1']
    #allocation7 [shape = 's32[2]{0}', space=sflag, size = 0x8, scoped, tag = 'scoped memory for tpu_custom_call.1']
    #allocation8 [shape = 'u8[65536]{0}', space=vmem, size = 0x10000, scoped, tag = 'input window, operand 2, single buffered']
    #allocation9 [shape = 'u8[131072]{0}', space=vmem, size = 0x20000, scoped, tag = 'output window, operand 0']
    #allocation10 [shape = 'u8[2048]{0}', space=vmem, size = 0x800, scoped, tag = 'output window, operand 1']
    #allocation11 [shape = 's32[2]{0}', space=sflag, size = 0x8, scoped, tag = 'scoped memory for tpu_custom_call.1']
    %11 = vsyncpa [#allocation4], 0
    %s12 = scalar_lea.sflag [#allocation4], 1
    %13 = vsyncpa %s12, 0
    %14 = vsyncpa [#allocation7], 0
    %s15 = scalar_lea.sflag [#allocation7], 1
    %16 = vsyncpa %s15, 0
    %17 = vsyncpa [#allocation5], 0
    %s18 = scalar_lea.sflag [#allocation5], 1
    %19 = vsyncpa %s18, 0
    %20 = vsyncpa [#allocation11], 0
    %s21 = scalar_lea.sflag [#allocation11], 1
    %22 = vsyncpa %s21, 0
    loop: start=0, step=1, limit=11
    $region2: #{tpu_custom_call.1} parent=1 // loop_pre_header
      _
    $region3: #{tpu_custom_call.1} parent=1 // loop_header
      %s24 = sphi 0, %s28
      %p25 = scmp.ge.s32.totalorder %s24, 11
      %s31 = sphi 0, %s43
      %s32 = sphi 0, %s39
      %s33 = sphi 0, %s31
      %s34 = sphi 0, %s32
      %s35 = sphi 0, %s33
      %s36 = sphi 0, %s34
      %s48 = sphi 0, %s50
      %s51 = sphi 0, %s48
      %s52 = sphi 0, %s51
      %s68 = sphi 0, %s52
      %s74 = sphi 0, %s76
      %s77 = sphi 0, %s74
      %s78 = sphi 0, %s77
      %s94 = sphi 0, %s78
      %s98 = sphi 0, %s98
      %s100 = sphi 0, %s98
      %s101 = sphi 0, %s100
      %s115 = sphi 0, %s101
      %s119 = sphi 0, %s119
      %s121 = sphi 0, %s119
      %s122 = sphi 0, %s121
      %s136 = sphi 0, %s122
      %s142 = sphi 0, %s144
      %s145 = sphi 0, %s142
      %s146 = sphi 0, %s145
      %s162 = sphi 0, %s146
      %s168 = sphi 0, %s170
      %s171 = sphi 0, %s168
      %s172 = sphi 0, %s171
      %s188 = sphi 0, %s172
    $region4: #{tpu_custom_call.1} parent=1 // loop_header_branch
      %27 = sbr.rel (%p25) target = $region8
    $region5: #{tpu_custom_call.1} parent=1 // loop_body
      %s29 = ssub.s32 %s24, 1
      %s30 = ssub.s32 %s24, 2
      %s37 = sadd.s32 1, %s32
      %p38 = scmp.ge.s32.totalorder %s37, 3
      %s39 = scalar_select %p38, 0, %s37
      %s40 = sadd.s32 1, %s31
      %s41 = scalar_select %p38, %s40, %s31
      %p42 = scmp.ge.s32.totalorder %s41, 3
      %s43 = scalar_select %p42, 0, %s41
      %s44 = ssub.s32 %s31, %s43
      %s45 = ssub.s32 %s32, %s39
      %s46 = sor.u32 %s44, %s45
      %p47 = scmp.eq.s32.totalorder %s46, 0
      %s49 = sadd.s32 %s48, 1
      %s50 = scalar_select %p47, %s48, %s49
      %p53 = pneg %p47
      %p54 = scmp.eq.s32.totalorder %s24, 8
      %p55 = por %p53, %p54
      %p56 = scmp.ne.s32.totalorder %s48, %s51
      %p57 = scmp.eq.s32.totalorder %s24, 0
      %p58 = por %p56, %p57
      %p59 = scmp.ne.s32.totalorder %s48, %s51
      %p60 = scmp.eq.s32.totalorder %s29, 8
      %p61 = por %p59, %p60
      %p62 = scmp.ne.s32.totalorder %s51, %s52
      %p63 = scmp.eq.s32.totalorder %s29, 0
      %p64 = por %p62, %p63
      %p65 = scmp.ne.s32.totalorder %s51, %s52
      %p66 = scmp.eq.s32.totalorder %s30, 8
      %p67 = por %p65, %p66
      %p69 = scmp.ne.s32.totalorder %s52, %s68
      %p70 = scmp.eq.s32.totalorder %s30, 0
      %p71 = por %p69, %p70
      %s72 = ssub.s32 %s32, %s39
      %p73 = scmp.eq.s32.totalorder %s72, 0
      %s75 = sadd.s32 %s74, 1
      %s76 = scalar_select %p73, %s74, %s75
      %p79 = pneg %p73
      %p80 = scmp.eq.s32.totalorder %s24, 8
      %p81 = por %p79, %p80
      %p82 = scmp.ne.s32.totalorder %s74, %s77
      %p83 = scmp.eq.s32.totalorder %s24, 0
      %p84 = por %p82, %p83
      %p85 = scmp.ne.s32.totalorder %s74, %s77
      %p86 = scmp.eq.s32.totalorder %s29, 8
      %p87 = por %p85, %p86
      %p88 = scmp.ne.s32.totalorder %s77, %s78
      %p89 = scmp.eq.s32.totalorder %s29, 0
      %p90 = por %p88, %p89
      %p91 = scmp.ne.s32.totalorder %s77, %s78
      %p92 = scmp.eq.s32.totalorder %s30, 8
      %p93 = por %p91, %p92
      %p95 = scmp.ne.s32.totalorder %s78, %s94
      %p96 = scmp.eq.s32.totalorder %s30, 0
      %p97 = por %p95, %p96
      %s99 = sadd.s32 %s98, 1
      %p102 = scmp.eq.s32.totalorder %s24, 8
      %p103 = scmp.ne.s32.totalorder %s98, %s100
      %p104 = scmp.eq.s32.totalorder %s24, 0
      %p105 = por %p103, %p104
      %p106 = scmp.ne.s32.totalorder %s98, %s100
      %p107 = scmp.eq.s32.totalorder %s29, 8
      %p108 = por %p106, %p107
      %p109 = scmp.ne.s32.totalorder %s100, %s101
      %p110 = scmp.eq.s32.totalorder %s29, 0
      %p111 = por %p109, %p110
      %p112 = scmp.ne.s32.totalorder %s100, %s101
      %p113 = scmp.eq.s32.totalorder %s30, 8
      %p114 = por %p112, %p113
      %p116 = scmp.ne.s32.totalorder %s101, %s115
      %p117 = scmp.eq.s32.totalorder %s30, 0
      %p118 = por %p116, %p117
      %s120 = sadd.s32 %s119, 1
      %p123 = scmp.eq.s32.totalorder %s24, 8
      %p124 = scmp.ne.s32.totalorder %s119, %s121
      %p125 = scmp.eq.s32.totalorder %s24, 0
      %p126 = por %p124, %p125
      %p127 = scmp.ne.s32.totalorder %s119, %s121
      %p128 = scmp.eq.s32.totalorder %s29, 8
      %p129 = por %p127, %p128
      %p130 = scmp.ne.s32.totalorder %s121, %s122
      %p131 = scmp.eq.s32.totalorder %s29, 0
      %p132 = por %p130, %p131
      %p133 = scmp.ne.s32.totalorder %s121, %s122
      %p134 = scmp.eq.s32.totalorder %s30, 8
      %p135 = por %p133, %p134
      %p137 = scmp.ne.s32.totalorder %s122, %s136
      %p138 = scmp.eq.s32.totalorder %s30, 0
      %p139 = por %p137, %p138
      %s140 = ssub.s32 %s31, %s43
      %p141 = scmp.eq.s32.totalorder %s140, 0
      %s143 = sadd.s32 %s142, 1
      %s144 = scalar_select %p141, %s142, %s143
      %p147 = pneg %p141
      %p148 = scmp.eq.s32.totalorder %s24, 8
      %p149 = por %p147, %p148
      %p150 = scmp.ne.s32.totalorder %s142, %s145
      %p151 = scmp.eq.s32.totalorder %s24, 0
      %p152 = por %p150, %p151
      %p153 = scmp.ne.s32.totalorder %s142, %s145
      %p154 = scmp.eq.s32.totalorder %s29, 8
      %p155 = por %p153, %p154
      %p156 = scmp.ne.s32.totalorder %s145, %s146
      %p157 = scmp.eq.s32.totalorder %s29, 0
      %p158 = por %p156, %p157
      %p159 = scmp.ne.s32.totalorder %s145, %s146
      %p160 = scmp.eq.s32.totalorder %s30, 8
      %p161 = por %p159, %p160
      %p163 = scmp.ne.s32.totalorder %s146, %s162
      %p164 = scmp.eq.s32.totalorder %s30, 0
      %p165 = por %p163, %p164
      %s166 = ssub.s32 %s31, %s43
      %p167 = scmp.eq.s32.totalorder %s166, 0
      %s169 = sadd.s32 %s168, 1
      %s170 = scalar_select %p167, %s168, %s169
      %p173 = pneg %p167
      %p174 = scmp.eq.s32.totalorder %s24, 8
      %p175 = por %p173, %p174
      %p176 = scmp.ne.s32.totalorder %s168, %s171
      %p177 = scmp.eq.s32.totalorder %s24, 0
      %p178 = por %p176, %p177
      %p179 = scmp.ne.s32.totalorder %s168, %s171
      %p180 = scmp.eq.s32.totalorder %s29, 8
      %p181 = por %p179, %p180
      %p182 = scmp.ne.s32.totalorder %s171, %s172
      %p183 = scmp.eq.s32.totalorder %s29, 0
      %p184 = por %p182, %p183
      %p185 = scmp.ne.s32.totalorder %s171, %s172
      %p186 = scmp.eq.s32.totalorder %s30, 8
      %p187 = por %p185, %p186
      %p189 = scmp.ne.s32.totalorder %s172, %s188
      %p190 = scmp.eq.s32.totalorder %s30, 0
      %p191 = por %p189, %p190
      %p192 = scmp.le.s32.totalorder 1, %s24
      %p193 = scmp.lt.s32.totalorder %s24, 10
      %p194 = pnand %p192, %p193
      %p195 = pneg %p194
      // Predicated region
      $region9: #{tpu_custom_call.1} parent=5 // pred_check
        _
      $region10: #{tpu_custom_call.1} parent=5 // pred_check_branch
        %197 = sbr.rel (%p194) target = $region12
      $region11: #{tpu_custom_call.1} parent=5 // pred_region
        %s198 = ssub.s32 %s24, 1
        // Predicated region
        $region13: #{tpu_custom_call.1} parent=11 // pred_check
          %p199 = pneg %p111
        $region14: #{tpu_custom_call.1} parent=11 // pred_check_branch
          %201 = sbr.rel (%p199) target = $region16
        $region15: #{tpu_custom_call.1} parent=11 // pred_region
          %s203 = ssub.s32 2048, 2048
          %204 = vsyncadd [#allocation7], %s203
          %s205 = sshll.u32 [#allocation8], 4
          %s206 = int_to_ptr.vmem [resolvable:$true] %s205
          %211 = dma.hbm_to_vmem [thread:$0]  %s2, 2048, %s206, [#allocation7], 128, 128, 8
        $region16: #{tpu_custom_call.1} parent=11 // pred_fallthru
          _
        // Predicated region
        $region17: #{tpu_custom_call.1} parent=11 // pred_check
          %p212 = pneg %p132
        $region18: #{tpu_custom_call.1} parent=11 // pred_check_branch
          %214 = sbr.rel (%p212) target = $region20
        $region19: #{tpu_custom_call.1} parent=11 // pred_region
          _
        $region20: #{tpu_custom_call.1} parent=11 // pred_fallthru
          _
      $region12: #{tpu_custom_call.1} parent=5 // pred_fallthru
        _
      %p215 = scmp.lt.s32.totalorder %s24, 9
      // Predicated region
      $region21: #{tpu_custom_call.1} parent=5 // pred_check
        %p216 = pneg %p215
      $region22: #{tpu_custom_call.1} parent=5 // pred_check_branch
        %218 = sbr.rel (%p216) target = $region24
      $region23: #{tpu_custom_call.1} parent=5 // pred_region
        // Predicated region
        $region25: #{tpu_custom_call.1} parent=23 // pred_check
          %p219 = pneg %p58
        $region26: #{tpu_custom_call.1} parent=23 // pred_check_branch
          %221 = sbr.rel (%p219) target = $region28
        $region27: #{tpu_custom_call.1} parent=23 // pred_region
          %s222 = sand.u32 %s48, 1
          %s223 = scalar_lea.sflag [#allocation4], %s222
          %s224 = sand.u32 %s48, 1
          %s225 = smul.addr %s224, 32
          %s226 = scalar_lea.vmem [#allocation3], %s225
          %s227 = smul.u32 4, %s31
          %s229 = ssub.s32 512, 512
          %230 = vsyncadd %s223, %s229
          %s231 = smul.addr %s227, 3
          %s232 = sadd.s32 %s32, %s231
          %s233 = smul.addr %s232, 128
          %s234 = scalar_lea.hbm %s0, %s233
          %s235 = sshll.u32 %s226, 4
          %s236 = int_to_ptr.vmem [resolvable:$true] %s235
          %241 = dma.hbm_to_vmem [thread:$0]  %s234, 512, %s236, %s223, 384, 128, 8
        $region28: #{tpu_custom_call.1} parent=23 // pred_fallthru
          _
        // Predicated region
        $region29: #{tpu_custom_call.1} parent=23 // pred_check
          %p242 = pneg %p84
        $region30: #{tpu_custom_call.1} parent=23 // pred_check_branch
          %244 = sbr.rel (%p242) target = $region32
        $region31: #{tpu_custom_call.1} parent=23 // pred_region
          %s245 = sand.u32 %s24, 1
          %s246 = scalar_lea.sflag [#allocation7], %s245
          %s247 = sand.u32 %s74, 1
          %s248 = smul.addr %s247, 64
          %s249 = scalar_lea.vmem [#allocation6], %s248
          %s250 = smul.u32 16, %s32
          %s252 = ssub.s32 1024, 1024
          %253 = vsyncadd %s246, %s252
          %s254 = smul.addr %s250, 64
          %s255 = scalar_lea.hbm %s1, %s254
          %s256 = sshll.u32 %s249, 4
          %s257 = int_to_ptr.vmem [resolvable:$true] %s256
          %262 = dma.hbm_to_vmem [thread:$0]  %s255, 1024, %s257, %s246, 64, 64, 4
        $region32: #{tpu_custom_call.1} parent=23 // pred_fallthru
          _
      $region24: #{tpu_custom_call.1} parent=5 // pred_fallthru
        _
      %p263 = scmp.le.s32.totalorder 1, %s24
      %p264 = scmp.lt.s32.totalorder %s24, 10
      %p265 = pnand %p263, %p264
      %p266 = pneg %p265
      // Predicated region
      $region33: #{tpu_custom_call.1} parent=5 // pred_check
        _
      $region34: #{tpu_custom_call.1} parent=5 // pred_check_branch
        %268 = sbr.rel (%p265) target = $region36
      $region35: #{tpu_custom_call.1} parent=5 // pred_region
        %s269 = ssub.s32 %s24, 1
        %s270 = sand.u32 %s51, 1
        %s271 = scalar_lea.sflag [#allocation4], %s270
        %s272 = sand.u32 %s51, 1
        %s273 = smul.addr %s272, 32
        %s274 = scalar_lea.vmem [#allocation3], %s273
        // Predicated region
        $region37: #{tpu_custom_call.1} parent=35 // pred_check
          %p275 = pneg %p64
        $region38: #{tpu_custom_call.1} parent=35 // pred_check_branch
          %277 = sbr.rel (%p275) target = $region40
        $region39: #{tpu_custom_call.1} parent=35 // pred_region
          %278 = dma.done %s271, 512
        $region40: #{tpu_custom_call.1} parent=35 // pred_fallthru
          _
        %s279 = sand.u32 %s29, 1
        %s280 = scalar_lea.sflag [#allocation7], %s279
        %s281 = sand.u32 %s77, 1
        %s282 = smul.addr %s281, 64
        %s283 = scalar_lea.vmem [#allocation6], %s282
        // Predicated region
        $region41: #{tpu_custom_call.1} parent=35 // pred_check
          %p284 = pneg %p90
        $region42: #{tpu_custom_call.1} parent=35 // pred_check_branch
          %286 = sbr.rel (%p284) target = $region44
        $region43: #{tpu_custom_call.1} parent=35 // pred_region
          %287 = dma.done %s280, 1024
        $region44: #{tpu_custom_call.1} parent=35 // pred_fallthru
          _
        // Predicated region
        $region45: #{tpu_custom_call.1} parent=35 // pred_check
          %p288 = pneg %p111
        $region46: #{tpu_custom_call.1} parent=35 // pred_check_branch
          %290 = sbr.rel (%p288) target = $region48
        $region47: #{tpu_custom_call.1} parent=35 // pred_region
          %291 = dma.done [#allocation7], 2048
        $region48: #{tpu_custom_call.1} parent=35 // pred_fallthru
          _
        %s292 = sand.u32 %s51, 1
        %s293 = scalar_lea.sflag [#allocation4], %s292
        %s294 = sand.u32 %s51, 1
        %s295 = smul.addr %s294, 32
        %s296 = scalar_lea.vmem [#allocation3], %s295
        %p297 = pneg %p64
        %p298 = pneg %p61
        %s299 = sand.u32 %s29, 1
        %s300 = scalar_lea.sflag [#allocation7], %s299
        %s301 = sand.u32 %s77, 1
        %s302 = smul.addr %s301, 64
        %s303 = scalar_lea.vmem [#allocation6], %s302
        %p304 = pneg %p90
        %p305 = pneg %p87
        %p306 = pneg %p111
        %p307 = pneg %p108
        %p308 = pneg %p132
        %p309 = pneg %p129
        %p310 = pneg %p158
        %p311 = pneg %p155
        %s312 = sand.u32 %s145, 1
        %s313 = scalar_lea.sflag [#allocation5], %s312
        %s314 = sand.u32 %s145, 1
        %s315 = smul.addr %s314, 128
        %s316 = scalar_lea.vmem [#allocation9], %s315
        %p317 = pneg %p184
        %p318 = pneg %p181
        %s319 = sand.u32 %s171, 1
        %s320 = scalar_lea.sflag [#allocation11], %s319
        %s321 = sand.u32 %s171, 1
        %s322 = smul.addr %s321, 2
        %s323 = scalar_lea.vmem [#allocation10], %s322
        %s324 = smul.u32 4, %s33
        %s325 = smul.u32 16, %s34
        %s326 = smul.u32 16, %s33
        %s328 = smul.u32 %s33, 128
        %p329 = scmp.eq.s32.totalorder %s34, 0
        // Predicated region
        $region49: #{tpu_custom_call.1} parent=35 // pred_check
          %p330 = pneg %p329
        $region50: #{tpu_custom_call.1} parent=35 // pred_check_branch
          %332 = sbr.rel (%p330) target = $region52
        $region51: #{tpu_custom_call.1} parent=35 // pred_region
          %333 = vst [vmem:[#allocation2] sm:$0xff] 0.0
          %334 = vst [vmem:[#allocation2 + $0x8] sm:$0xff] 0.0
          %335 = vst [vmem:[#allocation2 + $0x10] sm:$0xff] 0.0
          %336 = vst [vmem:[#allocation2 + $0x18] sm:$0xff] 0.0
          %337 = vst [vmem:[#allocation2 + $0x20] sm:$0xff] 0.0
          %338 = vst [vmem:[#allocation2 + $0x28] sm:$0xff] 0.0
          %339 = vst [vmem:[#allocation2 + $0x30] sm:$0xff] 0.0
          %340 = vst [vmem:[#allocation2 + $0x38] sm:$0xff] 0.0
          %341 = vst [vmem:[#allocation2 + $0x40] sm:$0xff] 0.0
          %342 = vst [vmem:[#allocation2 + $0x48] sm:$0xff] 0.0
          %343 = vst [vmem:[#allocation2 + $0x50] sm:$0xff] 0.0
          %344 = vst [vmem:[#allocation2 + $0x58] sm:$0xff] 0.0
          %345 = vst [vmem:[#allocation2 + $0x60] sm:$0xff] 0.0
          %346 = vst [vmem:[#allocation2 + $0x68] sm:$0xff] 0.0
          %347 = vst [vmem:[#allocation2 + $0x70] sm:$0xff] 0.0
          %348 = vst [vmem:[#allocation2 + $0x78] sm:$0xff] 0.0
        $region52: #{tpu_custom_call.1} parent=35 // pred_fallthru
          _
        %v349 = vld [vmem:[#allocation2] sm:$0xff]
        %v350 = vld [vmem:[#allocation2 + $0x8] sm:$0xff]
        %v351 = vld [vmem:[#allocation2 + $0x10] sm:$0xff]
        %v352 = vld [vmem:[#allocation2 + $0x18] sm:$0xff]
        %v353 = vld [vmem:[#allocation2 + $0x20] sm:$0xff]
        %v354 = vld [vmem:[#allocation2 + $0x28] sm:$0xff]
        %v355 = vld [vmem:[#allocation2 + $0x30] sm:$0xff]
        %v356 = vld [vmem:[#allocation2 + $0x38] sm:$0xff]
        %v357 = vld [vmem:[#allocation2 + $0x40] sm:$0xff]
        %v358 = vld [vmem:[#allocation2 + $0x48] sm:$0xff]
        %v359 = vld [vmem:[#allocation2 + $0x50] sm:$0xff]
        %v360 = vld [vmem:[#allocation2 + $0x58] sm:$0xff]
        %v361 = vld [vmem:[#allocation2 + $0x60] sm:$0xff]
        %v362 = vld [vmem:[#allocation2 + $0x68] sm:$0xff]
        %v363 = vld [vmem:[#allocation2 + $0x70] sm:$0xff]
        %v364 = vld [vmem:[#allocation2 + $0x78] sm:$0xff]
        %v365 = vld [vmem:[%s274] sm:$0xff]
        %v366 = vld [vmem:[%s274 + $0x8] sm:$0xff]
        %v367 = vld [vmem:[%s274 + $0x10] sm:$0xff]
        %v368 = vld [vmem:[%s274 + $0x18] sm:$0xff]
        %v369 = vunpack.c.l.s8.bf16 %v365
        %v370 = vunpack.c.h.s8.bf16 %v365
        %v371 = vunpack.c.l.s8.bf16 %v366
        %v372 = vunpack.c.h.s8.bf16 %v366
        %v373 = vunpack.c.l.s8.bf16 %v367
        %v374 = vunpack.c.h.s8.bf16 %v367
        %v375 = vunpack.c.l.s8.bf16 %v368
        %v376 = vunpack.c.h.s8.bf16 %v368
        %v377 = vld [vmem:[%s283] sm:$0xf]
        %v378 = vld [vmem:[%s283 + $0x4] sm:$0xf]
        %v379 = vld [vmem:[%s283 + $0x8] sm:$0xf]
        %v380 = vld [vmem:[%s283 + $0xc] sm:$0xf]
        %v381 = vld [vmem:[%s283 + $0x10] sm:$0xf]
        %v382 = vld [vmem:[%s283 + $0x14] sm:$0xf]
        %v383 = vld [vmem:[%s283 + $0x18] sm:$0xf]
        %v384 = vld [vmem:[%s283 + $0x1c] sm:$0xf]
        %v385 = vld [vmem:[%s283 + $0x20] sm:$0xf]
        %v386 = vld [vmem:[%s283 + $0x24] sm:$0xf]
        %v387 = vld [vmem:[%s283 + $0x28] sm:$0xf]
        %v388 = vld [vmem:[%s283 + $0x2c] sm:$0xf]
        %v389 = vld [vmem:[%s283 + $0x30] sm:$0xf]
        %v390 = vld [vmem:[%s283 + $0x34] sm:$0xf]
        %v391 = vld [vmem:[%s283 + $0x38] sm:$0xf]
        %v392 = vld [vmem:[%s283 + $0x3c] sm:$0xf]
        %v409 = vunpack.c.l.b16 %v377
        %v410 = vunpack.c.l.b16 %v378
        %v411 = vunpack.c.l.b16 %v379
        %v412 = vunpack.c.l.b16 %v380
        %v413 = vunpack.c.l.b16 %v381
        %v414 = vunpack.c.l.b16 %v382
        %v415 = vunpack.c.l.b16 %v383
        %v416 = vunpack.c.l.b16 %v384
        %v417 = vunpack.c.l.b16 %v385
        %v418 = vunpack.c.l.b16 %v386
        %v419 = vunpack.c.l.b16 %v387
        %v420 = vunpack.c.l.b16 %v388
        %v421 = vunpack.c.l.b16 %v389
        %v422 = vunpack.c.l.b16 %v390
        %v423 = vunpack.c.l.b16 %v391
        %v424 = vunpack.c.l.b16 %v392
        %v425 = vpack.c.b16 %v410, %v409
        %v426 = vpack.c.b16 %v412, %v411
        %v427 = vpack.c.b16 %v414, %v413
        %v428 = vpack.c.b16 %v416, %v415
        %v429 = vpack.c.b16 %v418, %v417
        %v430 = vpack.c.b16 %v420, %v419
        %v431 = vpack.c.b16 %v422, %v421
        %v432 = vpack.c.b16 %v424, %v423
        %441 = vmatprep.subr.bf16.mxu0 0
        %442 = vmatpush1.bf16.msra.mxu0 %v432
        %443 = vmatprep.subr.bf16.mxu0 0
        %444 = vmatpush1.bf16.msra.mxu0 %v431
        %445 = vmatprep.subr.bf16.mxu0 0
        %446 = vmatpush1.bf16.msra.mxu0 %v430
        %447 = vmatprep.subr.bf16.mxu0 0
        %448 = vmatpush1.bf16.msra.mxu0 %v429
        %449 = vmatprep.subr.bf16.mxu0 0
        %450 = vmatpush1.bf16.msra.mxu0 %v428
        %451 = vmatprep.subr.bf16.mxu0 0
        %452 = vmatpush1.bf16.msra.mxu0 %v427
        %453 = vmatprep.subr.bf16.mxu0 0
        %454 = vmatpush1.bf16.msra.mxu0 %v426
        %455 = vmatprep.subr.bf16.mxu0 0
        %456 = vmatpush1.bf16.msra.mxu0 %v425
        %457 = vmatprep.subr.bf16.mxu0 0
        %458 = vmatpush2.bf16.msra.mxu0 0
        %459 = vmatprep.subr.bf16.mxu0 0
        %460 = vmatpush2.bf16.msra.mxu0 0
        %461 = vmatprep.subr.bf16.mxu0 0
        %462 = vmatpush2.bf16.msra.mxu0 0
        %463 = vmatprep.subr.bf16.mxu0 0
        %464 = vmatpush2.bf16.msra.mxu0 0
        %465 = vmatprep.subr.bf16.mxu0 0
        %466 = vmatpush2.bf16.msra.mxu0 0
        %467 = vmatprep.subr.bf16.mxu0 0
        %468 = vmatpush2.bf16.msra.mxu0 0
        %469 = vmatprep.subr.bf16.mxu0 0
        %470 = vmatpush2.bf16.msra.mxu0 0
        %471 = vmatprep.subr.bf16.mxu0 0
        %472 = vmatpush2.bf16.msra.mxu0 0
        %473 = vmatprep.mubr.bf16.mxu0 0
        %474 = vmatmul.mubr.bf16.gmra.mxu0 %v369
        %v475 = vpop.f32.mrf.mxu0
        %v476 = vadd.f32 0.0, %v475
        %v477 = vpop.f32.mrf.mxu0
        %v478 = vpop.f32.mrf.mxu0
        %v479 = vadd.f32 0.0, %v478
        %v480 = vpop.f32.mrf.mxu0
        %481 = vmatprep.mubr.bf16.mxu0 0
        %482 = vmatmul.mubr.bf16.gmra.mxu0 %v370
        %v483 = vpop.f32.mrf.mxu0
        %v484 = vadd.f32 0.0, %v483
        %v485 = vpop.f32.mrf.mxu0
        %v486 = vpop.f32.mrf.mxu0
        %v487 = vadd.f32 0.0, %v486
        %v488 = vpop.f32.mrf.mxu0
        %489 = vmatprep.mubr.bf16.mxu0 0
        %490 = vmatmul.mubr.bf16.gmra.mxu0 %v371
        %v491 = vpop.f32.mrf.mxu0
        %v492 = vadd.f32 0.0, %v491
        %v493 = vpop.f32.mrf.mxu0
        %v494 = vpop.f32.mrf.mxu0
        %v495 = vadd.f32 0.0, %v494
        %v496 = vpop.f32.mrf.mxu0
        %497 = vmatprep.mubr.bf16.mxu0 0
        %498 = vmatmul.mubr.bf16.gmra.mxu0 %v372
        %v499 = vpop.f32.mrf.mxu0
        %v500 = vadd.f32 0.0, %v499
        %v501 = vpop.f32.mrf.mxu0
        %v502 = vpop.f32.mrf.mxu0
        %v503 = vadd.f32 0.0, %v502
        %v504 = vpop.f32.mrf.mxu0
        %505 = vmatprep.mubr.bf16.mxu0 0
        %506 = vmatmul.mubr.bf16.gmra.mxu0 %v373
        %v507 = vpop.f32.mrf.mxu0
        %v508 = vadd.f32 0.0, %v507
        %v509 = vpop.f32.mrf.mxu0
        %v510 = vpop.f32.mrf.mxu0
        %v511 = vadd.f32 0.0, %v510
        %v512 = vpop.f32.mrf.mxu0
        %513 = vmatprep.mubr.bf16.mxu0 0
        %514 = vmatmul.mubr.bf16.gmra.mxu0 %v374
        %v515 = vpop.f32.mrf.mxu0
        %v516 = vadd.f32 0.0, %v515
        %v517 = vpop.f32.mrf.mxu0
        %v518 = vpop.f32.mrf.mxu0
        %v519 = vadd.f32 0.0, %v518
        %v520 = vpop.f32.mrf.mxu0
        %521 = vmatprep.mubr.bf16.mxu0 0
        %522 = vmatmul.mubr.bf16.gmra.mxu0 %v375
        %v523 = vpop.f32.mrf.mxu0
        %v524 = vadd.f32 0.0, %v523
        %v525 = vpop.f32.mrf.mxu0
        %v526 = vpop.f32.mrf.mxu0
        %v527 = vadd.f32 0.0, %v526
        %v528 = vpop.f32.mrf.mxu0
        %529 = vmatprep.mubr.bf16.mxu0 0
        %530 = vmatmul.mubr.bf16.gmra.mxu0 %v376
        %v531 = vpop.f32.mrf.mxu0
        %v532 = vadd.f32 0.0, %v531
        %v533 = vpop.f32.mrf.mxu0
        %v534 = vpop.f32.mrf.mxu0
        %v535 = vadd.f32 0.0, %v534
        %v536 = vpop.f32.mrf.mxu0
        %537 = vdwg.mxu0
        %v538 = vadd.f32 %v349, %v476
        %v539 = vadd.f32 %v350, %v479
        %v540 = vadd.f32 %v351, %v484
        %v541 = vadd.f32 %v352, %v487
        %v542 = vadd.f32 %v353, %v492
        %v543 = vadd.f32 %v354, %v495
        %v544 = vadd.f32 %v355, %v500
        %v545 = vadd.f32 %v356, %v503
        %v546 = vadd.f32 %v357, %v508
        %v547 = vadd.f32 %v358, %v511
        %v548 = vadd.f32 %v359, %v516
        %v549 = vadd.f32 %v360, %v519
        %v550 = vadd.f32 %v361, %v524
        %v551 = vadd.f32 %v362, %v527
        %v552 = vadd.f32 %v363, %v532
        %v553 = vadd.f32 %v364, %v535
        %554 = vst [vmem:[#allocation2] sm:$0xff] %v538
        %555 = vst [vmem:[#allocation2 + $0x8] sm:$0xff] %v539
        %556 = vst [vmem:[#allocation2 + $0x10] sm:$0xff] %v540
        %557 = vst [vmem:[#allocation2 + $0x18] sm:$0xff] %v541
        %558 = vst [vmem:[#allocation2 + $0x20] sm:$0xff] %v542
        %559 = vst [vmem:[#allocation2 + $0x28] sm:$0xff] %v543
        %560 = vst [vmem:[#allocation2 + $0x30] sm:$0xff] %v544
        %561 = vst [vmem:[#allocation2 + $0x38] sm:$0xff] %v545
        %562 = vst [vmem:[#allocation2 + $0x40] sm:$0xff] %v546
        %563 = vst [vmem:[#allocation2 + $0x48] sm:$0xff] %v547
        %564 = vst [vmem:[#allocation2 + $0x50] sm:$0xff] %v548
        %565 = vst [vmem:[#allocation2 + $0x58] sm:$0xff] %v549
        %566 = vst [vmem:[#allocation2 + $0x60] sm:$0xff] %v550
        %567 = vst [vmem:[#allocation2 + $0x68] sm:$0xff] %v551
        %568 = vst [vmem:[#allocation2 + $0x70] sm:$0xff] %v552
        %569 = vst [vmem:[#allocation2 + $0x78] sm:$0xff] %v553
        %p570 = scmp.eq.s32.totalorder %s34, 2
        // Predicated region
        $region53: #{tpu_custom_call.1} parent=35 // pred_check
          %p571 = pneg %p570
        $region54: #{tpu_custom_call.1} parent=35 // pred_check_branch
          %573 = sbr.rel (%p571) target = $region56
        $region55: #{tpu_custom_call.1} parent=35 // pred_region
          %v574 = vld [vmem:[#allocation2] sm:$0xff]
          %v575 = vld [vmem:[#allocation2 + $0x8] sm:$0xff]
          %v576 = vld [vmem:[#allocation2 + $0x10] sm:$0xff]
          %v577 = vld [vmem:[#allocation2 + $0x18] sm:$0xff]
          %v578 = vld [vmem:[#allocation2 + $0x20] sm:$0xff]
          %v579 = vld [vmem:[#allocation2 + $0x28] sm:$0xff]
          %v580 = vld [vmem:[#allocation2 + $0x30] sm:$0xff]
          %v581 = vld [vmem:[#allocation2 + $0x38] sm:$0xff]
          %v582 = vld [vmem:[#allocation2 + $0x40] sm:$0xff]
          %v583 = vld [vmem:[#allocation2 + $0x48] sm:$0xff]
          %v584 = vld [vmem:[#allocation2 + $0x50] sm:$0xff]
          %v585 = vld [vmem:[#allocation2 + $0x58] sm:$0xff]
          %v586 = vld [vmem:[#allocation2 + $0x60] sm:$0xff]
          %v587 = vld [vmem:[#allocation2 + $0x68] sm:$0xff]
          %v588 = vld [vmem:[#allocation2 + $0x70] sm:$0xff]
          %v589 = vld [vmem:[#allocation2 + $0x78] sm:$0xff]
          %v590 = vmax.f32 %v574, 1.0
          %v591 = vmax.f32 %v575, 1.0
          %v592 = vmax.f32 %v576, 1.0
          %v593 = vmax.f32 %v577, 1.0
          %v594 = vmax.f32 %v578, 1.0
          %v595 = vmax.f32 %v579, 1.0
          %v596 = vmax.f32 %v580, 1.0
          %v597 = vmax.f32 %v581, 1.0
          %v598 = vmax.f32 %v582, 1.0
          %v599 = vmax.f32 %v583, 1.0
          %v600 = vmax.f32 %v584, 1.0
          %v601 = vmax.f32 %v585, 1.0
          %v602 = vmax.f32 %v586, 1.0
          %v603 = vmax.f32 %v587, 1.0
          %v604 = vmax.f32 %v588, 1.0
          %v605 = vmax.f32 %v589, 1.0
          %v606 = vrcp.pop %v590
          %v607 = vmul.f32 1.0, %v606
          %v608 = vrcp.pop %v591
          %v609 = vmul.f32 1.0, %v608
          %v610 = vrcp.pop %v592
          %v611 = vmul.f32 1.0, %v610
          %v612 = vrcp.pop %v593
          %v613 = vmul.f32 1.0, %v612
          %v614 = vrcp.pop %v594
          %v615 = vmul.f32 1.0, %v614
          %v616 = vrcp.pop %v595
          %v617 = vmul.f32 1.0, %v616
          %v618 = vrcp.pop %v596
          %v619 = vmul.f32 1.0, %v618
          %v620 = vrcp.pop %v597
          %v621 = vmul.f32 1.0, %v620
          %v622 = vrcp.pop %v598
          %v623 = vmul.f32 1.0, %v622
          %v624 = vrcp.pop %v599
          %v625 = vmul.f32 1.0, %v624
          %v626 = vrcp.pop %v600
          %v627 = vmul.f32 1.0, %v626
          %v628 = vrcp.pop %v601
          %v629 = vmul.f32 1.0, %v628
          %v630 = vrcp.pop %v602
          %v631 = vmul.f32 1.0, %v630
          %v632 = vrcp.pop %v603
          %v633 = vmul.f32 1.0, %v632
          %v634 = vrcp.pop %v604
          %v635 = vmul.f32 1.0, %v634
          %v636 = vrcp.pop %v605
          %v637 = vmul.f32 1.0, %v636
          %639 = vset.pattern.permute.xlu0 32
          %640 = vperm.xlu0 %639, %v607
          %v641 = vpop.permute.xlu0 %640
          %644 = vset.pattern.permute.xlu0 32
          %645 = vperm.xlu0 %644, %v609
          %v646 = vpop.permute.xlu0 %645
          %649 = vset.pattern.permute.xlu0 32
          %650 = vperm.xlu0 %649, %v611
          %v651 = vpop.permute.xlu0 %650
          %654 = vset.pattern.permute.xlu0 32
          %655 = vperm.xlu0 %654, %v613
          %v656 = vpop.permute.xlu0 %655
          %659 = vset.pattern.permute.xlu0 32
          %660 = vperm.xlu0 %659, %v615
          %v661 = vpop.permute.xlu0 %660
          %664 = vset.pattern.permute.xlu0 32
          %665 = vperm.xlu0 %664, %v617
          %v666 = vpop.permute.xlu0 %665
          %669 = vset.pattern.permute.xlu0 32
          %670 = vperm.xlu0 %669, %v619
          %v671 = vpop.permute.xlu0 %670
          %674 = vset.pattern.permute.xlu0 32
          %675 = vperm.xlu0 %674, %v621
          %v676 = vpop.permute.xlu0 %675
          %679 = vset.pattern.permute.xlu0 32
          %680 = vperm.xlu0 %679, %v623
          %v681 = vpop.permute.xlu0 %680
          %684 = vset.pattern.permute.xlu0 32
          %685 = vperm.xlu0 %684, %v625
          %v686 = vpop.permute.xlu0 %685
          %689 = vset.pattern.permute.xlu0 32
          %690 = vperm.xlu0 %689, %v627
          %v691 = vpop.permute.xlu0 %690
          %694 = vset.pattern.permute.xlu0 32
          %695 = vperm.xlu0 %694, %v629
          %v696 = vpop.permute.xlu0 %695
          %699 = vset.pattern.permute.xlu0 32
          %700 = vperm.xlu0 %699, %v631
          %v701 = vpop.permute.xlu0 %700
          %704 = vset.pattern.permute.xlu0 32
          %705 = vperm.xlu0 %704, %v633
          %v706 = vpop.permute.xlu0 %705
          %709 = vset.pattern.permute.xlu0 32
          %710 = vperm.xlu0 %709, %v635
          %v711 = vpop.permute.xlu0 %710
          %714 = vset.pattern.permute.xlu0 32
          %715 = vperm.xlu0 %714, %v637
          %v716 = vpop.permute.xlu0 %715
          %v718 = vmul.f32 %v574, %v641
          %v719 = vmul.f32 %v575, %v646
          %v720 = vmul.f32 %v576, %v651
          %v721 = vmul.f32 %v577, %v656
          %v722 = vmul.f32 %v578, %v661
          %v723 = vmul.f32 %v579, %v666
          %v724 = vmul.f32 %v580, %v671
          %v725 = vmul.f32 %v581, %v676
          %v726 = vmul.f32 %v582, %v681
          %v727 = vmul.f32 %v583, %v686
          %v728 = vmul.f32 %v584, %v691
          %v729 = vmul.f32 %v585, %v696
          %v730 = vmul.f32 %v586, %v701
          %v731 = vmul.f32 %v587, %v706
          %v732 = vmul.f32 %v588, %v711
          %v733 = vmul.f32 %v589, %v716
          %v734 = vld [vmem:[#allocation8] sm:$0xff]
          %v735 = vld [vmem:[#allocation8 + $0x8] sm:$0xff]
          %v736 = vld [vmem:[#allocation8 + $0x10] sm:$0xff]
          %v737 = vld [vmem:[#allocation8 + $0x18] sm:$0xff]
          %v738 = vld [vmem:[#allocation8 + $0x20] sm:$0xff]
          %v739 = vld [vmem:[#allocation8 + $0x28] sm:$0xff]
          %v740 = vld [vmem:[#allocation8 + $0x30] sm:$0xff]
          %v741 = vld [vmem:[#allocation8 + $0x38] sm:$0xff]
          %v742 = vld [vmem:[#allocation8 + $0x40] sm:$0xff]
          %v743 = vld [vmem:[#allocation8 + $0x48] sm:$0xff]
          %v744 = vld [vmem:[#allocation8 + $0x50] sm:$0xff]
          %v745 = vld [vmem:[#allocation8 + $0x58] sm:$0xff]
          %v746 = vld [vmem:[#allocation8 + $0x60] sm:$0xff]
          %v747 = vld [vmem:[#allocation8 + $0x68] sm:$0xff]
          %v748 = vld [vmem:[#allocation8 + $0x70] sm:$0xff]
          %v749 = vld [vmem:[#allocation8 + $0x78] sm:$0xff]
          %v750 = vld [vmem:[%s3] sm:$0x1]
          %v752 = vlaneseq
          %v753 = vshrl.u32 %v752, 7
          %v754 = vsub.s32 0, %v753
          %v755 = vrot.slane %v750, %v754
          %757 = vmatprep.subr.mxu0 0.0
          %758 = vmatpush1.msra.mxu0 %v749
          %759 = vmatprep.subr.mxu0 0.0
          %760 = vmatpush1.msra.mxu0 %v748
          %761 = vmatprep.subr.mxu0 0.0
          %762 = vmatpush1.msra.mxu0 %v747
          %763 = vmatprep.subr.mxu0 0.0
          %764 = vmatpush1.msra.mxu0 %v746
          %765 = vmatprep.subr.mxu0 0.0
          %766 = vmatpush1.msra.mxu0 %v745
          %767 = vmatprep.subr.mxu0 0.0
          %768 = vmatpush1.msra.mxu0 %v744
          %769 = vmatprep.subr.mxu0 0.0
          %770 = vmatpush1.msra.mxu0 %v743
          %771 = vmatprep.subr.mxu0 0.0
          %772 = vmatpush1.msra.mxu0 %v742
          %773 = vmatprep.subr.mxu0 0.0
          %774 = vmatpush1.msra.mxu0 %v741
          %775 = vmatprep.subr.mxu0 0.0
          %776 = vmatpush1.msra.mxu0 %v740
          %777 = vmatprep.subr.mxu0 0.0
          %778 = vmatpush1.msra.mxu0 %v739
          %779 = vmatprep.subr.mxu0 0.0
          %780 = vmatpush1.msra.mxu0 %v738
          %781 = vmatprep.subr.mxu0 0.0
          %782 = vmatpush1.msra.mxu0 %v737
          %783 = vmatprep.subr.mxu0 0.0
          %784 = vmatpush1.msra.mxu0 %v736
          %785 = vmatprep.subr.mxu0 0.0
          %786 = vmatpush1.msra.mxu0 %v735
          %787 = vmatprep.subr.mxu0 0.0
          %788 = vmatpush1.msra.mxu0 %v734
          %789 = vmatprep.subr.mxu0 0.0
          %790 = vmatpush2.msra.mxu0 0.0
          %791 = vmatprep.subr.mxu0 0.0
          %792 = vmatpush2.msra.mxu0 0.0
          %793 = vmatprep.subr.mxu0 0.0
          %794 = vmatpush2.msra.mxu0 0.0
          %795 = vmatprep.subr.mxu0 0.0
          %796 = vmatpush2.msra.mxu0 0.0
          %797 = vmatprep.subr.mxu0 0.0
          %798 = vmatpush2.msra.mxu0 0.0
          %799 = vmatprep.subr.mxu0 0.0
          %800 = vmatpush2.msra.mxu0 0.0
          %801 = vmatprep.subr.mxu0 0.0
          %802 = vmatpush2.msra.mxu0 0.0
          %803 = vmatprep.subr.mxu0 0.0
          %804 = vmatpush2.msra.mxu0 0.0
          %805 = vmatprep.subr.mxu0 0.0
          %806 = vmatpush2.msra.mxu0 0.0
          %807 = vmatprep.subr.mxu0 0.0
          %808 = vmatpush2.msra.mxu0 0.0
          %809 = vmatprep.subr.mxu0 0.0
          %810 = vmatpush2.msra.mxu0 0.0
          %811 = vmatprep.subr.mxu0 0.0
          %812 = vmatpush2.msra.mxu0 0.0
          %813 = vmatprep.subr.mxu0 0.0
          %814 = vmatpush2.msra.mxu0 0.0
          %815 = vmatprep.subr.mxu0 0.0
          %816 = vmatpush2.msra.mxu0 0.0
          %817 = vmatprep.subr.mxu0 0.0
          %818 = vmatpush2.msra.mxu0 0.0
          %819 = vmatprep.subr.mxu0 0.0
          %820 = vmatpush2.msra.mxu0 0.0
          %821 = vmatprep.mubr.f32.mxu0 0.0
          %822 = vmatmul.mubr.f32.gmra.mxu0 %v718
          %v823 = vpop.f32.mrf.mxu0
          %v824 = vadd.f32 %v755, %v823
          %v825 = vpop.f32.mrf.mxu0
          %826 = vmatprep.mubr.f32.mxu0 0.0
          %827 = vmatmul.mubr.f32.gmra.mxu0 %v719
          %v828 = vpop.f32.mrf.mxu0
          %v829 = vadd.f32 %v755, %v828
          %v830 = vpop.f32.mrf.mxu0
          %831 = vmatprep.mubr.f32.mxu0 0.0
          %832 = vmatmul.mubr.f32.gmra.mxu0 %v720
          %v833 = vpop.f32.mrf.mxu0
          %v834 = vadd.f32 %v755, %v833
          %v835 = vpop.f32.mrf.mxu0
          %836 = vmatprep.mubr.f32.mxu0 0.0
          %837 = vmatmul.mubr.f32.gmra.mxu0 %v721
          %v838 = vpop.f32.mrf.mxu0
          %v839 = vadd.f32 %v755, %v838
          %v840 = vpop.f32.mrf.mxu0
          %841 = vmatprep.mubr.f32.mxu0 0.0
          %842 = vmatmul.mubr.f32.gmra.mxu0 %v722
          %v843 = vpop.f32.mrf.mxu0
          %v844 = vadd.f32 %v755, %v843
          %v845 = vpop.f32.mrf.mxu0
          %846 = vmatprep.mubr.f32.mxu0 0.0
          %847 = vmatmul.mubr.f32.gmra.mxu0 %v723
          %v848 = vpop.f32.mrf.mxu0
          %v849 = vadd.f32 %v755, %v848
          %v850 = vpop.f32.mrf.mxu0
          %851 = vmatprep.mubr.f32.mxu0 0.0
          %852 = vmatmul.mubr.f32.gmra.mxu0 %v724
          %v853 = vpop.f32.mrf.mxu0
          %v854 = vadd.f32 %v755, %v853
          %v855 = vpop.f32.mrf.mxu0
          %856 = vmatprep.mubr.f32.mxu0 0.0
          %857 = vmatmul.mubr.f32.gmra.mxu0 %v725
          %v858 = vpop.f32.mrf.mxu0
          %v859 = vadd.f32 %v755, %v858
          %v860 = vpop.f32.mrf.mxu0
          %861 = vmatprep.mubr.f32.mxu0 0.0
          %862 = vmatmul.mubr.f32.gmra.mxu0 %v726
          %v863 = vpop.f32.mrf.mxu0
          %v864 = vadd.f32 %v755, %v863
          %v865 = vpop.f32.mrf.mxu0
          %866 = vmatprep.mubr.f32.mxu0 0.0
          %867 = vmatmul.mubr.f32.gmra.mxu0 %v727
          %v868 = vpop.f32.mrf.mxu0
          %v869 = vadd.f32 %v755, %v868
          %v870 = vpop.f32.mrf.mxu0
          %871 = vmatprep.mubr.f32.mxu0 0.0
          %872 = vmatmul.mubr.f32.gmra.mxu0 %v728
          %v873 = vpop.f32.mrf.mxu0
          %v874 = vadd.f32 %v755, %v873
          %v875 = vpop.f32.mrf.mxu0
          %876 = vmatprep.mubr.f32.mxu0 0.0
          %877 = vmatmul.mubr.f32.gmra.mxu0 %v729
          %v878 = vpop.f32.mrf.mxu0
          %v879 = vadd.f32 %v755, %v878
          %v880 = vpop.f32.mrf.mxu0
          %881 = vmatprep.mubr.f32.mxu0 0.0
          %882 = vmatmul.mubr.f32.gmra.mxu0 %v730
          %v883 = vpop.f32.mrf.mxu0
          %v884 = vadd.f32 %v755, %v883
          %v885 = vpop.f32.mrf.mxu0
          %886 = vmatprep.mubr.f32.mxu0 0.0
          %887 = vmatmul.mubr.f32.gmra.mxu0 %v731
          %v888 = vpop.f32.mrf.mxu0
          %v889 = vadd.f32 %v755, %v888
          %v890 = vpop.f32.mrf.mxu0
          %891 = vmatprep.mubr.f32.mxu0 0.0
          %892 = vmatmul.mubr.f32.gmra.mxu0 %v732
          %v893 = vpop.f32.mrf.mxu0
          %v894 = vadd.f32 %v755, %v893
          %v895 = vpop.f32.mrf.mxu0
          %896 = vmatprep.mubr.f32.mxu0 0.0
          %897 = vmatmul.mubr.f32.gmra.mxu0 %v733
          %v898 = vpop.f32.mrf.mxu0
          %v899 = vadd.f32 %v755, %v898
          %v900 = vpop.f32.mrf.mxu0
          %901 = vdwg.mxu0
          %v902 = vmax.f32 %v824, 0.0
          %v903 = vmax.f32 %v829, 0.0
          %v904 = vmax.f32 %v834, 0.0
          %v905 = vmax.f32 %v839, 0.0
          %v906 = vmax.f32 %v844, 0.0
          %v907 = vmax.f32 %v849, 0.0
          %v908 = vmax.f32 %v854, 0.0
          %v909 = vmax.f32 %v859, 0.0
          %v910 = vmax.f32 %v864, 0.0
          %v911 = vmax.f32 %v869, 0.0
          %v912 = vmax.f32 %v874, 0.0
          %v913 = vmax.f32 %v879, 0.0
          %v914 = vmax.f32 %v884, 0.0
          %v915 = vmax.f32 %v889, 0.0
          %v916 = vmax.f32 %v894, 0.0
          %v917 = vmax.f32 %v899, 0.0
          %v918 = vlaneseq
          %v919 = vshrl.u32 %v918, 7
          %v920 = vadd.s32 %v919, 8
          %v921 = vadd.s32 %v919, 16
          %v922 = vadd.s32 %v919, 24
          %v923 = vadd.s32 %v919, 32
          %v924 = vadd.s32 %v919, 40
          %v925 = vadd.s32 %v919, 48
          %v926 = vadd.s32 %v919, 56
          %v927 = vadd.s32 %v919, 64
          %v928 = vadd.s32 %v919, 72
          %v929 = vadd.s32 %v919, 80
          %v930 = vadd.s32 %v919, 88
          %v931 = vadd.s32 %v919, 96
          %v932 = vadd.s32 %v919, 104
          %v933 = vadd.s32 %v919, 112
          %v934 = vadd.s32 %v919, 120
          %v935 = vstv %s328
          %v936 = vadd.s32 %v935, %v919
          %v937 = vadd.s32 %v935, %v920
          %v938 = vadd.s32 %v935, %v921
          %v939 = vadd.s32 %v935, %v922
          %v940 = vadd.s32 %v935, %v923
          %v941 = vadd.s32 %v935, %v924
          %v942 = vadd.s32 %v935, %v925
          %v943 = vadd.s32 %v935, %v926
          %v944 = vadd.s32 %v935, %v927
          %v945 = vadd.s32 %v935, %v928
          %v946 = vadd.s32 %v935, %v929
          %v947 = vadd.s32 %v935, %v930
          %v948 = vadd.s32 %v935, %v931
          %v949 = vadd.s32 %v935, %v932
          %v950 = vadd.s32 %v935, %v933
          %v951 = vadd.s32 %v935, %v934
          %vm952 = vcmp.lt.s32.totalorder %v936, 300
          %vm953 = vcmp.lt.s32.totalorder %v937, 300
          %vm954 = vcmp.lt.s32.totalorder %v938, 300
          %vm955 = vcmp.lt.s32.totalorder %v939, 300
          %vm956 = vcmp.lt.s32.totalorder %v940, 300
          %vm957 = vcmp.lt.s32.totalorder %v941, 300
          %vm958 = vcmp.lt.s32.totalorder %v942, 300
          %vm959 = vcmp.lt.s32.totalorder %v943, 300
          %vm960 = vcmp.lt.s32.totalorder %v944, 300
          %vm961 = vcmp.lt.s32.totalorder %v945, 300
          %vm962 = vcmp.lt.s32.totalorder %v946, 300
          %vm963 = vcmp.lt.s32.totalorder %v947, 300
          %vm964 = vcmp.lt.s32.totalorder %v948, 300
          %vm965 = vcmp.lt.s32.totalorder %v949, 300
          %vm966 = vcmp.lt.s32.totalorder %v950, 300
          %vm967 = vcmp.lt.s32.totalorder %v951, 300
          %v968 = vsel %vm952, 1, 0
          %v969 = vsel %vm953, 1, 0
          %v970 = vsel %vm954, 1, 0
          %v971 = vsel %vm955, 1, 0
          %v972 = vsel %vm956, 1, 0
          %v973 = vsel %vm957, 1, 0
          %v974 = vsel %vm958, 1, 0
          %v975 = vsel %vm959, 1, 0
          %v976 = vsel %vm960, 1, 0
          %v977 = vsel %vm961, 1, 0
          %v978 = vsel %vm962, 1, 0
          %v979 = vsel %vm963, 1, 0
          %v980 = vsel %vm964, 1, 0
          %v981 = vsel %vm965, 1, 0
          %v982 = vsel %vm966, 1, 0
          %v983 = vsel %vm967, 1, 0
          %v984 = vcvt.s32.f32 %v968
          %v985 = vcvt.s32.f32 %v969
          %v986 = vcvt.s32.f32 %v970
          %v987 = vcvt.s32.f32 %v971
          %v988 = vcvt.s32.f32 %v972
          %v989 = vcvt.s32.f32 %v973
          %v990 = vcvt.s32.f32 %v974
          %v991 = vcvt.s32.f32 %v975
          %v992 = vcvt.s32.f32 %v976
          %v993 = vcvt.s32.f32 %v977
          %v994 = vcvt.s32.f32 %v978
          %v995 = vcvt.s32.f32 %v979
          %v996 = vcvt.s32.f32 %v980
          %v997 = vcvt.s32.f32 %v981
          %v998 = vcvt.s32.f32 %v982
          %v999 = vcvt.s32.f32 %v983
          %v1000 = vmul.f32 %v902, %v984
          %v1001 = vmul.f32 %v903, %v985
          %v1002 = vmul.f32 %v904, %v986
          %v1003 = vmul.f32 %v905, %v987
          %v1004 = vmul.f32 %v906, %v988
          %v1005 = vmul.f32 %v907, %v989
          %v1006 = vmul.f32 %v908, %v990
          %v1007 = vmul.f32 %v909, %v991
          %v1008 = vmul.f32 %v910, %v992
          %v1009 = vmul.f32 %v911, %v993
          %v1010 = vmul.f32 %v912, %v994
          %v1011 = vmul.f32 %v913, %v995
          %v1012 = vmul.f32 %v914, %v996
          %v1013 = vmul.f32 %v915, %v997
          %v1014 = vmul.f32 %v916, %v998
          %v1015 = vmul.f32 %v917, %v999
          %1016 = vst [vmem:[%s316] sm:$0xff] %v1000
          %1017 = vst [vmem:[%s316 + $0x8] sm:$0xff] %v1001
          %1018 = vst [vmem:[%s316 + $0x10] sm:$0xff] %v1002
          %1019 = vst [vmem:[%s316 + $0x18] sm:$0xff] %v1003
          %1020 = vst [vmem:[%s316 + $0x20] sm:$0xff] %v1004
          %1021 = vst [vmem:[%s316 + $0x28] sm:$0xff] %v1005
          %1022 = vst [vmem:[%s316 + $0x30] sm:$0xff] %v1006
          %1023 = vst [vmem:[%s316 + $0x38] sm:$0xff] %v1007
          %1024 = vst [vmem:[%s316 + $0x40] sm:$0xff] %v1008
          %1025 = vst [vmem:[%s316 + $0x48] sm:$0xff] %v1009
          %1026 = vst [vmem:[%s316 + $0x50] sm:$0xff] %v1010
          %1027 = vst [vmem:[%s316 + $0x58] sm:$0xff] %v1011
          %1028 = vst [vmem:[%s316 + $0x60] sm:$0xff] %v1012
          %1029 = vst [vmem:[%s316 + $0x68] sm:$0xff] %v1013
          %1030 = vst [vmem:[%s316 + $0x70] sm:$0xff] %v1014
          %1031 = vst [vmem:[%s316 + $0x78] sm:$0xff] %v1015
          %v1032 = vadd.f32 %v1000, %v1001
          %v1033 = vadd.f32 %v1032, %v1002
          %v1034 = vadd.f32 %v1033, %v1003
          %v1035 = vadd.f32 %v1034, %v1004
          %v1036 = vadd.f32 %v1035, %v1005
          %v1037 = vadd.f32 %v1036, %v1006
          %v1038 = vadd.f32 %v1037, %v1007
          %v1039 = vadd.f32 %v1038, %v1008
          %v1040 = vadd.f32 %v1039, %v1009
          %v1041 = vadd.f32 %v1040, %v1010
          %v1042 = vadd.f32 %v1041, %v1011
          %v1043 = vadd.f32 %v1042, %v1012
          %v1044 = vadd.f32 %v1043, %v1013
          %v1045 = vadd.f32 %v1044, %v1014
          %v1046 = vadd.f32 %v1045, %v1015
          %v1047 = vrot.slane %v1046, 4
          %v1048 = vadd.f32 %v1046, %v1047
          %v1049 = vrot.slane %v1048, 2
          %v1050 = vadd.f32 %v1048, %v1049
          %v1051 = vrot.slane %v1050, 1
          %v1052 = vadd.f32 %v1050, %v1051
          %1053 = vst [vmem:[%s323] sm:$0x1] %v1052
          %v1054 = vmul.f32 %v1000, %v1000
          %v1055 = vmul.f32 %v1001, %v1001
          %v1056 = vmul.f32 %v1002, %v1002
          %v1057 = vmul.f32 %v1003, %v1003
          %v1058 = vmul.f32 %v1004, %v1004
          %v1059 = vmul.f32 %v1005, %v1005
          %v1060 = vmul.f32 %v1006, %v1006
          %v1061 = vmul.f32 %v1007, %v1007
          %v1062 = vmul.f32 %v1008, %v1008
          %v1063 = vmul.f32 %v1009, %v1009
          %v1064 = vmul.f32 %v1010, %v1010
          %v1065 = vmul.f32 %v1011, %v1011
          %v1066 = vmul.f32 %v1012, %v1012
          %v1067 = vmul.f32 %v1013, %v1013
          %v1068 = vmul.f32 %v1014, %v1014
          %v1069 = vmul.f32 %v1015, %v1015
          %v1070 = vadd.f32 %v1054, %v1055
          %v1071 = vadd.f32 %v1070, %v1056
          %v1072 = vadd.f32 %v1071, %v1057
          %v1073 = vadd.f32 %v1072, %v1058
          %v1074 = vadd.f32 %v1073, %v1059
          %v1075 = vadd.f32 %v1074, %v1060
          %v1076 = vadd.f32 %v1075, %v1061
          %v1077 = vadd.f32 %v1076, %v1062
          %v1078 = vadd.f32 %v1077, %v1063
          %v1079 = vadd.f32 %v1078, %v1064
          %v1080 = vadd.f32 %v1079, %v1065
          %v1081 = vadd.f32 %v1080, %v1066
          %v1082 = vadd.f32 %v1081, %v1067
          %v1083 = vadd.f32 %v1082, %v1068
          %v1084 = vadd.f32 %v1083, %v1069
          %v1085 = vrot.slane %v1084, 4
          %v1086 = vadd.f32 %v1084, %v1085
          %v1087 = vrot.slane %v1086, 2
          %v1088 = vadd.f32 %v1086, %v1087
          %v1089 = vrot.slane %v1088, 1
          %v1090 = vadd.f32 %v1088, %v1089
          %1091 = vst [vmem:[%s323 + $0x1] sm:$0x1] %v1090
        $region56: #{tpu_custom_call.1} parent=35 // pred_fallthru
          _
        %s1092 = sand.u32 %s145, 1
        %s1093 = scalar_lea.sflag [#allocation5], %s1092
        %s1094 = sand.u32 %s145, 1
        %s1095 = smul.addr %s1094, 128
        %s1096 = scalar_lea.vmem [#allocation9], %s1095
        %s1097 = sand.u32 %s171, 1
        %s1098 = scalar_lea.sflag [#allocation11], %s1097
        %s1099 = sand.u32 %s171, 1
        %s1100 = smul.addr %s1099, 2
        %s1101 = scalar_lea.vmem [#allocation10], %s1100
        // Predicated region
        $region57: #{tpu_custom_call.1} parent=35 // pred_check
          %p1102 = pneg %p155
        $region58: #{tpu_custom_call.1} parent=35 // pred_check_branch
          %1104 = sbr.rel (%p1102) target = $region60
        $region59: #{tpu_custom_call.1} parent=35 // pred_region
          %s1105 = smul.u32 16, %s33
          %s1107 = ssub.s32 2048, 2048
          %1108 = vsyncadd %s1093, %s1107
          %s1109 = smul.addr %s1105, 128
          %s1110 = scalar_lea.hbm %s4, %s1109
          %s1111 = sshll.u32 %s1096, 4
          %s1112 = int_to_ptr.vmem [resolvable:$true] %s1111
          %1117 = dma.vmem_to_hbm [thread:$0]  %s1112, 2048, %s1110, %s1093, 128, 128, 8
        $region60: #{tpu_custom_call.1} parent=35 // pred_fallthru
          _
        // Predicated region
        $region61: #{tpu_custom_call.1} parent=35 // pred_check
          %p1118 = pneg %p181
        $region62: #{tpu_custom_call.1} parent=35 // pred_check_branch
          %1120 = sbr.rel (%p1118) target = $region64
        $region63: #{tpu_custom_call.1} parent=35 // pred_region
          %s1122 = ssub.s32 32, 32
          %1123 = vsyncadd %s1098, %s1122
          %s1124 = smul.addr %s33, 32
          %s1125 = scalar_lea.hbm %s5, %s1124
          %s1127 = sshll.u32 %s1101, 4
          %s1128 = int_to_ptr.vmem [resolvable:$true] %s1127
          %1130 = dma.vmem_to_hbm [thread:$0]  %s1128, 32, %s1125, %s1098
        $region64: #{tpu_custom_call.1} parent=35 // pred_fallthru
          _
      $region36: #{tpu_custom_call.1} parent=5 // pred_fallthru
        _
      %p1131 = scmp.le.s32.totalorder 2, %s24
      // Predicated region
      $region65: #{tpu_custom_call.1} parent=5 // pred_check
        %p1132 = pneg %p1131
      $region66: #{tpu_custom_call.1} parent=5 // pred_check_branch
        %1134 = sbr.rel (%p1132) target = $region68
      $region67: #{tpu_custom_call.1} parent=5 // pred_region
        %s1135 = ssub.s32 %s24, 2
        // Predicated region
        $region69: #{tpu_custom_call.1} parent=67 // pred_check
          %p1136 = pneg %p161
        $region70: #{tpu_custom_call.1} parent=67 // pred_check_branch
          %1138 = sbr.rel (%p1136) target = $region72
        $region71: #{tpu_custom_call.1} parent=67 // pred_region
          %s1139 = sand.u32 %s146, 1
          %s1140 = scalar_lea.sflag [#allocation5], %s1139
          %s1141 = sand.u32 %s146, 1
          %s1142 = smul.addr %s1141, 128
          %s1143 = scalar_lea.vmem [#allocation9], %s1142
          %1144 = dma.done %s1140, 2048
        $region72: #{tpu_custom_call.1} parent=67 // pred_fallthru
          _
        // Predicated region
        $region73: #{tpu_custom_call.1} parent=67 // pred_check
          %p1145 = pneg %p187
        $region74: #{tpu_custom_call.1} parent=67 // pred_check_branch
          %1147 = sbr.rel (%p1145) target = $region76
        $region75: #{tpu_custom_call.1} parent=67 // pred_region
          %s1148 = sand.u32 %s172, 1
          %s1149 = scalar_lea.sflag [#allocation11], %s1148
          %s1150 = sand.u32 %s172, 1
          %s1151 = smul.addr %s1150, 2
          %s1152 = scalar_lea.vmem [#allocation10], %s1151
          %1153 = dma.done %s1149, 32
        $region76: #{tpu_custom_call.1} parent=67 // pred_fallthru
          _
      $region68: #{tpu_custom_call.1} parent=5 // pred_fallthru
        _
    $region6: #{tpu_custom_call.1} parent=1 // loop_footer
      %s28 = sadd.s32 1, %s24
    $region7: #{tpu_custom_call.1} parent=1 // loop_footer_branch
      %23 = sbr.rel target = $region3
    $region8: #{tpu_custom_call.1} parent=1 // loop_exit
      _
    %1154 = vsyncpa [#allocation4], 1
    %s1155 = scalar_lea.sflag [#allocation4], 1
    %1156 = vsyncpa %s1155, 1
    %1157 = vsyncpa [#allocation7], 1
    %s1158 = scalar_lea.sflag [#allocation7], 1
    %1159 = vsyncpa %s1158, 1
    %1160 = vsyncpa [#allocation5], 1
    %s1161 = scalar_lea.sflag [#allocation5], 1
    %1162 = vsyncpa %s1161, 1
    %1163 = vsyncpa [#allocation11], 1
    %s1164 = scalar_lea.sflag [#allocation11], 1
    %1165 = vsyncpa %s1164, 1

</llo_original>
